<compile_context>
chip_gen: v7x
topology: tpu7x:2x2x1
jax: 0.10.0
libtpu: 0.0.40
codegen_flags: <defaults>
</compile_context>

<pallas_src>
import numpy as np
import jax
import jax.numpy as jnp
from jax.experimental import pallas as pl
from jax.experimental.pallas import tpu as pltpu


# ----------------------------- beta schedules ------------------------------ #

def _cosine_beta_schedule(timesteps, s=0.008):
    steps = timesteps + 1
    x = np.linspace(0, timesteps, steps, dtype=np.float64)
    alphas_cumprod = np.cos((x / timesteps + s) / (1 + s) * np.pi * 0.5) ** 2
    alphas_cumprod = alphas_cumprod / alphas_cumprod[0]
    betas = 1 - alphas_cumprod[1:] / alphas_cumprod[:-1]
    return np.clip(betas, 0, 0.999)


def _linear_beta_schedule(timesteps):
    scale = 1000 / timesteps
    return np.linspace(scale * 0.0001, scale * 0.02, timesteps, dtype=np.float64)


def make_schedule_buffers(timesteps=1000, beta_schedule="cosine"):
    """float64 schedule math on host, float32 buffers (matches register_buffer)."""
    if beta_schedule == "cosine":
        betas = _cosine_beta_schedule(timesteps)
    elif beta_schedule == "linear":
        betas = _linear_beta_schedule(timesteps)
    else:
        raise ValueError(f"unknown beta schedule {beta_schedule}")
    alphas = 1.0 - betas
    alphas_cumprod = np.cumprod(alphas, axis=0)
    sqrt_alphas_cumprod = jnp.asarray(np.sqrt(alphas_cumprod), dtype=jnp.float32)
    sqrt_one_minus_alphas_cumprod = jnp.asarray(
        np.sqrt(1.0 - alphas_cumprod), dtype=jnp.float32)
    return sqrt_alphas_cumprod, sqrt_one_minus_alphas_cumprod


# --------------------------------- kernels --------------------------------- #

def _q_sample_kernel(t_ref, sac_ref, somac_ref, img_ref, noise_ref, x_ref):
    # t_ref: (B,) int32 SMEM; sac_ref/somac_ref: (num_timesteps,) f32 SMEM
    # img_ref/noise_ref/x_ref: (1, C, T_HW) VMEM tiles
    b = pl.program_id(0)
    tt = t_ref[b]                      # torch `extract`: gather the per-batch t
    c1 = sac_ref[tt]                   # sqrt_alphas_cumprod[t]
    c2 = somac_ref[tt]                 # sqrt_one_minus_alphas_cumprod[t]

    img = img_ref[...].astype(jnp.float32)
    noise = noise_ref[...].astype(jnp.float32)
    x_start = img * 2.0 - 1.0          # normalize_to_neg_one_to_one
    x_ref[...] = (c1 * x_start + c2 * noise).astype(x_ref.dtype)


def _l1_partial_kernel(pred_ref, target_ref, out_ref):
    # pred_ref/target_ref: (1, C, T_HW) VMEM tiles; out_ref: (B, n_tiles) f32 SMEM
    b = pl.program_id(0)
    j = pl.program_id(1)
    diff = jnp.abs(pred_ref[...].astype(jnp.float32)
                   - target_ref[...].astype(jnp.float32))
    out_ref[b, j] = jnp.sum(diff)


# --------------------------------- wrapper --------------------------------- #

def _pick_hw_tile(hw, c, target_bytes=2 * 1024 * 1024):
    """Largest multiple of 128 that divides hw with an f32 (c, t) block ~<= target."""
    if hw % 128 != 0:
        return hw                      # full extent (allowed: equals array dim)
    c_pad = ((c + 7) // 8) * 8
    cap = max(128, (target_bytes // (4 * c_pad)) // 128 * 128)
    t = min(hw, cap)
    while t > 128 and hw % t != 0:
        t -= 128
    return t if hw % t == 0 else hw


def gaussian_diffusion_forward(img, t, noise,
                               sqrt_alphas_cumprod, sqrt_one_minus_alphas_cumprod,
                               denoise_fn, objective="pred_noise"):
    """Returns (l1 loss, x_t). Matches GaussianDiffusion.forward / p_losses."""
    B, C, H, W = img.shape
    HW = H * W
    t_hw = _pick_hw_tile(HW, C)
    n_tiles = HW // t_hw

    img3 = img.reshape(B, C, HW)
    noise3 = noise.reshape(B, C, HW)

    smem_spec = pl.BlockSpec(memory_space=pltpu.MemorySpace.SMEM)
    tile_spec = pl.BlockSpec((1, C, t_hw), lambda b, j: (b, 0, j))

    # --- kernel 1: normalize + q_sample ---
    x3 = pl.pallas_call(
        _q_sample_kernel,
        out_shape=jax.ShapeDtypeStruct((B, C, HW), img.dtype),
        grid=(B, n_tiles),
        in_specs=[smem_spec, smem_spec, smem_spec, tile_spec, tile_spec],
        out_specs=tile_spec,
        compiler_params=pltpu.CompilerParams(
            dimension_semantics=("parallel", "parallel"),
            vmem_limit_bytes=32 * 1024 * 1024,
        ),
    )(t.astype(jnp.int32),
      sqrt_alphas_cumprod.astype(jnp.float32),
      sqrt_one_minus_alphas_cumprod.astype(jnp.float32),
      img3, noise3)

    x = x3.reshape(B, C, H, W)

    # TODO(synk): denoise_fn is the external U-Net handed to GaussianDiffusion;
    # it runs as ordinary JAX here, not as part of this module's Pallas kernels.
    model_out = denoise_fn(x, t)

    if objective == "pred_noise":
        target3 = noise3
    elif objective == "pred_x0":
        target3 = (img3.astype(jnp.float32) * 2.0 - 1.0)
    else:
        raise ValueError(f"unknown objective {objective}")

    # --- kernel 2: L1 loss partial sums ---
    partials = pl.pallas_call(
        _l1_partial_kernel,
        out_shape=jax.ShapeDtypeStruct((B, n_tiles), jnp.float32),
        grid=(B, n_tiles),
        in_specs=[tile_spec, tile_spec],
        out_specs=pl.BlockSpec(memory_space=pltpu.MemorySpace.SMEM),
        compiler_params=pltpu.CompilerParams(
            dimension_semantics=("arbitrary", "arbitrary"),
            vmem_limit_bytes=32 * 1024 * 1024,
        ),
    )(model_out.reshape(B, C, HW).astype(jnp.float32),
      target3.astype(jnp.float32))

    loss = jnp.sum(partials) / (B * C * HW)
    return loss, x


# -------------------------------- reference -------------------------------- #

def _toy_denoise_fn(x, t):
    # TODO(synk): stand-in for the external U-Net denoiser (constructor argument).
    del t
    return jnp.tanh(x) * 0.5


def _forward_reference(img, t, noise, sqrt_ac, sqrt_om_ac, denoise_fn,
                       objective="pred_noise"):
    x_start = img.astype(jnp.float32) * 2.0 - 1.0
    c1 = sqrt_ac[t].reshape(-1, 1, 1, 1)
    c2 = sqrt_om_ac[t].reshape(-1, 1, 1, 1)
    x = c1 * x_start + c2 * noise
    model_out = denoise_fn(x, t)
    target = noise if objective == "pred_noise" else x_start
    loss = jnp.mean(jnp.abs(model_out - target))
    return loss, x


# ----------------------------------- main ----------------------------------- #

if __name__ == "__main__":
    key = jax.random.PRNGKey(0)
    B, C, H, W = 2, 4, 16, 16
    num_timesteps = 1000

    k_img, k_t, k_noise = jax.random.split(key, 3)
    img = jax.random.uniform(k_img, (B, C, H, W), dtype=jnp.float32)       # images in [0, 1]
    t = jax.random.randint(k_t, (B,), 0, num_timesteps, dtype=jnp.int32)   # forward samples t
    noise = jax.random.normal(k_noise, (B, C, H, W), dtype=jnp.float32)

    sqrt_ac, sqrt_om_ac = make_schedule_buffers(num_timesteps, "cosine")

    loss, x_t = gaussian_diffusion_forward(
        img, t, noise, sqrt_ac, sqrt_om_ac, _toy_denoise_fn)
    loss = jax.block_until_ready(loss)

    ref_loss, ref_x = _forward_reference(img, t, noise, sqrt_ac, sqrt_om_ac,
                                         _toy_denoise_fn)

    assert x_t.shape == (B, C, H, W)
    assert jnp.allclose(x_t, ref_x, atol=1e-5, rtol=1e-5)
    assert jnp.allclose(loss, ref_loss, atol=1e-5, rtol=1e-5)

    print("KERNEL_OK")
</pallas_src>

<mosaic_0001>
module attributes {stable_mosaic.version = 11 : i64} {
  func.func @_q_sample_kernel(%arg0: i32, %arg1: i32, %arg2: memref<2xi32, #tpu.memory_space<smem>>, %arg3: memref<1000xf32, #tpu.memory_space<smem>>, %arg4: memref<1000xf32, #tpu.memory_space<smem>>, %arg5: memref<1x4x256xf32, #tpu.memory_space<vmem>>, %arg6: memref<1x4x256xf32, #tpu.memory_space<vmem>>, %arg7: memref<1x4x256xf32, #tpu.memory_space<vmem>>) attributes {dimension_semantics = [#tpu.dimension_semantics<parallel>, #tpu.dimension_semantics<parallel>], iteration_bounds = array<i64: 2, 1>, scalar_prefetch = 0 : i64, scratch_operands = 0 : i64, tpu.core_type = #tpu.core_type<tc>, window_params = [{transform_indices = @transform_0, window_bounds = array<i64: 2>}, {transform_indices = @transform_1, window_bounds = array<i64: 1000>}, {transform_indices = @transform_2, window_bounds = array<i64: 1000>}, {transform_indices = @transform_3, window_bounds = array<i64: 1, 4, 256>}, {transform_indices = @transform_4, window_bounds = array<i64: 1, 4, 256>}, {transform_indices = @transform_5, window_bounds = array<i64: 1, 4, 256>}]} {
    %0 = arith.index_cast %arg0 : i32 to index
    %1 = memref.load %arg2[%0] : memref<2xi32, #tpu.memory_space<smem>>
    %2 = arith.index_cast %1 : i32 to index
    %3 = memref.load %arg3[%2] : memref<1000xf32, #tpu.memory_space<smem>>
    %4 = arith.index_cast %1 : i32 to index
    %5 = memref.load %arg4[%4] : memref<1000xf32, #tpu.memory_space<smem>>
    %c0 = arith.constant 0 : index
    %c0_0 = arith.constant 0 : index
    %c0_1 = arith.constant 0 : index
    %6 = vector.load %arg5[%c0, %c0_0, %c0_1] : memref<1x4x256xf32, #tpu.memory_space<vmem>>, vector<1x4x256xf32>
    %c0_2 = arith.constant 0 : index
    %c0_3 = arith.constant 0 : index
    %c0_4 = arith.constant 0 : index
    %7 = vector.load %arg6[%c0_2, %c0_3, %c0_4] : memref<1x4x256xf32, #tpu.memory_space<vmem>>, vector<1x4x256xf32>
    %cst = arith.constant 2.000000e+00 : f32
    %8 = vector.broadcast %cst : f32 to vector<1x4x256xf32>
    %9 = arith.mulf %6, %8 : vector<1x4x256xf32>
    %cst_5 = arith.constant 1.000000e+00 : f32
    %10 = vector.broadcast %cst_5 : f32 to vector<1x4x256xf32>
    %11 = arith.subf %9, %10 : vector<1x4x256xf32>
    %12 = vector.broadcast %3 : f32 to vector<1x4x256xf32>
    %13 = arith.mulf %12, %11 : vector<1x4x256xf32>
    %14 = vector.broadcast %5 : f32 to vector<1x4x256xf32>
    %15 = arith.mulf %14, %7 : vector<1x4x256xf32>
    %16 = arith.addf %13, %15 : vector<1x4x256xf32>
    %c0_6 = arith.constant 0 : index
    %c0_7 = arith.constant 0 : index
    %c0_8 = arith.constant 0 : index
    %17 = vector.load %arg7[%c0_6, %c0_7, %c0_8] : memref<1x4x256xf32, #tpu.memory_space<vmem>>, vector<1x4x256xf32>
    tpu.vector_store %arg7[%c0_6, %c0_7, %c0_8], %16 {strides = array<i32>} : memref<1x4x256xf32, #tpu.memory_space<vmem>>, vector<1x4x256xf32>,
    return
  }
  func.func @transform_0(%arg0: i32, %arg1: i32) -> i32 {
    %c0_i32 = arith.constant 0 : i32
    %c0_i32_0 = arith.constant 0 : i32
    return %c0_i32 : i32
  }
  func.func @transform_1(%arg0: i32, %arg1: i32) -> i32 {
    %c0_i32 = arith.constant 0 : i32
    %c0_i32_0 = arith.constant 0 : i32
    return %c0_i32 : i32
  }
  func.func @transform_2(%arg0: i32, %arg1: i32) -> i32 {
    %c0_i32 = arith.constant 0 : i32
    %c0_i32_0 = arith.constant 0 : i32
    return %c0_i32 : i32
  }
  func.func @transform_3(%arg0: i32, %arg1: i32) -> (i32, i32, i32) {
    %c0_i32 = arith.constant 0 : i32
    %c0_i32_0 = arith.constant 0 : i32
    return %arg0, %c0_i32, %arg1 : i32, i32, i32
  }
  func.func @transform_4(%arg0: i32, %arg1: i32) -> (i32, i32, i32) {
    %c0_i32 = arith.constant 0 : i32
    %c0_i32_0 = arith.constant 0 : i32
    return %arg0, %c0_i32, %arg1 : i32, i32, i32
  }
  func.func @transform_5(%arg0: i32, %arg1: i32) -> (i32, i32, i32) {
    %c0_i32 = arith.constant 0 : i32
    %c0_i32_0 = arith.constant 0 : i32
    return %arg0, %c0_i32, %arg1 : i32, i32, i32
  }
}

</mosaic_0001>

<llo_original>
// kernel: tpu_custom_call.1
$region0: #{tpu_custom_call.1}
  #allocation0 [shape = 'u32[]', space=smem, size = 0x4, offset = 0x4, fixed_abs, tag = 'smem constant byte address 0x4 - core index']
  #allocation1 [shape = 'u32[144,128]{1,0:T(1,128)}', space=vmem, size = 0x12000, scoped, tag = 'internal scratch']
  %s0 = inlined_call_operand.hbm [shape: s32[2], index: 0, kind: input, shape index: {}]
  %s1 = inlined_call_operand.hbm [shape: f32[1000], index: 1, kind: input, shape index: {}]
  %s2 = inlined_call_operand.hbm [shape: f32[1000], index: 2, kind: input, shape index: {}]
  %s3 = inlined_call_operand.hbm [shape: f32[2,4,256], index: 3, kind: input, shape index: {}]
  %s4 = inlined_call_operand.hbm [shape: f32[2,4,256], index: 4, kind: input, shape index: {}]
  %s5 = inlined_call_operand.hbm [shape: f32[2,4,256], index: 5, kind: output, shape index: {}]
  %s6 = sld [smem:[#allocation0]]
  $region73: #{tpu_custom_call.1} parent=0
    _
  %s8 = ssub.s32 1, %s6
  %s9 = scalar_select 0, %s8, %s6
  $region1: #{tpu_custom_call.1} parent=0
    #allocation2 [shape = 'u8[512]{0}', space=smem, size = 0x200, scoped, tag = 'input window, operand 0, single buffered']
    #allocation3 [shape = 's32[2]{0}', space=sflag, size = 0x8, scoped, tag = 'scoped memory for tpu_custom_call.1']
    #allocation4 [shape = 's32[2]{0}', space=sflag, size = 0x8, scoped, tag = 'scoped memory for tpu_custom_call.1']
    #allocation5 [shape = 's32[2]{0}', space=sflag, size = 0x8, scoped, tag = 'scoped memory for tpu_custom_call.1']
    #allocation6 [shape = 'u8[4096]{0}', space=smem, size = 0x1000, scoped, tag = 'input window, operand 1, single buffered']
    #allocation7 [shape = 's32[1]{0}', space=sflag, size = 0x4, scoped, tag = 'scoped memory for tpu_custom_call.1']
    #allocation8 [shape = 'u8[4096]{0}', space=smem, size = 0x1000, scoped, tag = 'input window, operand 2, single buffered']
    #allocation9 [shape = 'u8[8192]{0}', space=vmem, size = 0x2000, scoped, tag = 'input window, operand 3']
    #allocation10 [shape = 'u8[8192]{0}', space=vmem, size = 0x2000, scoped, tag = 'input window, operand 4']
    #allocation11 [shape = 's32[2]{0}', space=sflag, size = 0x8, scoped, tag = 'scoped memory for tpu_custom_call.1']
    #allocation12 [shape = 'u8[8192]{0}', space=vmem, size = 0x2000, scoped, tag = 'output window, operand 0']
    %10 = vsyncpa [#allocation5], 0
    %11 = vsyncpa [#allocation7], 0
    %12 = vsyncpa [#allocation3], 0
    %s13 = scalar_lea.sflag [#allocation3], 1
    %14 = vsyncpa %s13, 0
    %15 = vsyncpa [#allocation11], 0
    %s16 = scalar_lea.sflag [#allocation11], 1
    %17 = vsyncpa %s16, 0
    %18 = vsyncpa [#allocation4], 0
    %s19 = scalar_lea.sflag [#allocation4], 1
    %20 = vsyncpa %s19, 0
    loop: start=0, step=1, limit=4
    $region2: #{tpu_custom_call.1} parent=1 // loop_pre_header
      _
    $region3: #{tpu_custom_call.1} parent=1 // loop_header
      %s22 = sphi 0, %s26
      %p23 = scmp.ge.s32.totalorder %s22, 4
      %s29 = sphi 0, %s41
      %s30 = sphi 0, %s37
      %s31 = sphi 0, %s29
      %s32 = sphi 0, %s30
      %s33 = sphi 0, %s31
      %s34 = sphi 0, %s32
      %s42 = sphi 0, %s42
      %s44 = sphi 0, %s42
      %s45 = sphi 0, %s44
      %s59 = sphi 0, %s45
      %s63 = sphi 0, %s63
      %s65 = sphi 0, %s63
      %s66 = sphi 0, %s65
      %s80 = sphi 0, %s66
      %s84 = sphi 0, %s84
      %s86 = sphi 0, %s84
      %s87 = sphi 0, %s86
      %s101 = sphi 0, %s87
      %s109 = sphi 0, %s111
      %s112 = sphi 0, %s109
      %s113 = sphi 0, %s112
      %s129 = sphi 0, %s113
      %s137 = sphi 0, %s139
      %s140 = sphi 0, %s137
      %s141 = sphi 0, %s140
      %s157 = sphi 0, %s141
      %s165 = sphi 0, %s167
      %s168 = sphi 0, %s165
      %s169 = sphi 0, %s168
      %s185 = sphi 0, %s169
    $region4: #{tpu_custom_call.1} parent=1 // loop_header_branch
      %25 = sbr.rel (%p23) target = $region8
    $region5: #{tpu_custom_call.1} parent=1 // loop_body
      %s27 = ssub.s32 %s22, 1
      %s28 = ssub.s32 %s22, 2
      %s35 = sadd.s32 1, %s30
      %p36 = scmp.ge.s32.totalorder %s35, 1
      %s37 = scalar_select %p36, 0, %s35
      %s38 = sadd.s32 1, %s29
      %s39 = scalar_select %p36, %s38, %s29
      %p40 = scmp.ge.s32.totalorder %s39, 2
      %s41 = scalar_select %p40, 0, %s39
      %s43 = sadd.s32 %s42, 1
      %p46 = scmp.eq.s32.totalorder %s22, 1
      %p47 = scmp.ne.s32.totalorder %s42, %s44
      %p48 = scmp.eq.s32.totalorder %s22, 0
      %p49 = por %p47, %p48
      %p50 = scmp.ne.s32.totalorder %s42, %s44
      %p51 = scmp.eq.s32.totalorder %s27, 1
      %p52 = por %p50, %p51
      %p53 = scmp.ne.s32.totalorder %s44, %s45
      %p54 = scmp.eq.s32.totalorder %s27, 0
      %p55 = por %p53, %p54
      %p56 = scmp.ne.s32.totalorder %s44, %s45
      %p57 = scmp.eq.s32.totalorder %s28, 1
      %p58 = por %p56, %p57
      %p60 = scmp.ne.s32.totalorder %s45, %s59
      %p61 = scmp.eq.s32.totalorder %s28, 0
      %p62 = por %p60, %p61
      %s64 = sadd.s32 %s63, 1
      %p67 = scmp.eq.s32.totalorder %s22, 1
      %p68 = scmp.ne.s32.totalorder %s63, %s65
      %p69 = scmp.eq.s32.totalorder %s22, 0
      %p70 = por %p68, %p69
      %p71 = scmp.ne.s32.totalorder %s63, %s65
      %p72 = scmp.eq.s32.totalorder %s27, 1
      %p73 = por %p71, %p72
      %p74 = scmp.ne.s32.totalorder %s65, %s66
      %p75 = scmp.eq.s32.totalorder %s27, 0
      %p76 = por %p74, %p75
      %p77 = scmp.ne.s32.totalorder %s65, %s66
      %p78 = scmp.eq.s32.totalorder %s28, 1
      %p79 = por %p77, %p78
      %p81 = scmp.ne.s32.totalorder %s66, %s80
      %p82 = scmp.eq.s32.totalorder %s28, 0
      %p83 = por %p81, %p82
      %s85 = sadd.s32 %s84, 1
      %p88 = scmp.eq.s32.totalorder %s22, 1
      %p89 = scmp.ne.s32.totalorder %s84, %s86
      %p90 = scmp.eq.s32.totalorder %s22, 0
      %p91 = por %p89, %p90
      %p92 = scmp.ne.s32.totalorder %s84, %s86
      %p93 = scmp.eq.s32.totalorder %s27, 1
      %p94 = por %p92, %p93
      %p95 = scmp.ne.s32.totalorder %s86, %s87
      %p96 = scmp.eq.s32.totalorder %s27, 0
      %p97 = por %p95, %p96
      %p98 = scmp.ne.s32.totalorder %s86, %s87
      %p99 = scmp.eq.s32.totalorder %s28, 1
      %p100 = por %p98, %p99
      %p102 = scmp.ne.s32.totalorder %s87, %s101
      %p103 = scmp.eq.s32.totalorder %s28, 0
      %p104 = por %p102, %p103
      %s105 = ssub.s32 %s29, %s41
      %s106 = ssub.s32 %s30, %s37
      %s107 = sor.u32 %s105, %s106
      %p108 = scmp.eq.s32.totalorder %s107, 0
      %s110 = sadd.s32 %s109, 1
      %s111 = scalar_select %p108, %s109, %s110
      %p114 = pneg %p108
      %p115 = scmp.eq.s32.totalorder %s22, 1
      %p116 = por %p114, %p115
      %p117 = scmp.ne.s32.totalorder %s109, %s112
      %p118 = scmp.eq.s32.totalorder %s22, 0
      %p119 = por %p117, %p118
      %p120 = scmp.ne.s32.totalorder %s109, %s112
      %p121 = scmp.eq.s32.totalorder %s27, 1
      %p122 = por %p120, %p121
      %p123 = scmp.ne.s32.totalorder %s112, %s113
      %p124 = scmp.eq.s32.totalorder %s27, 0
      %p125 = por %p123, %p124
      %p126 = scmp.ne.s32.totalorder %s112, %s113
      %p127 = scmp.eq.s32.totalorder %s28, 1
      %p128 = por %p126, %p127
      %p130 = scmp.ne.s32.totalorder %s113, %s129
      %p131 = scmp.eq.s32.totalorder %s28, 0
      %p132 = por %p130, %p131
      %s133 = ssub.s32 %s29, %s41
      %s134 = ssub.s32 %s30, %s37
      %s135 = sor.u32 %s133, %s134
      %p136 = scmp.eq.s32.totalorder %s135, 0
      %s138 = sadd.s32 %s137, 1
      %s139 = scalar_select %p136, %s137, %s138
      %p142 = pneg %p136
      %p143 = scmp.eq.s32.totalorder %s22, 1
      %p144 = por %p142, %p143
      %p145 = scmp.ne.s32.totalorder %s137, %s140
      %p146 = scmp.eq.s32.totalorder %s22, 0
      %p147 = por %p145, %p146
      %p148 = scmp.ne.s32.totalorder %s137, %s140
      %p149 = scmp.eq.s32.totalorder %s27, 1
      %p150 = por %p148, %p149
      %p151 = scmp.ne.s32.totalorder %s140, %s141
      %p152 = scmp.eq.s32.totalorder %s27, 0
      %p153 = por %p151, %p152
      %p154 = scmp.ne.s32.totalorder %s140, %s141
      %p155 = scmp.eq.s32.totalorder %s28, 1
      %p156 = por %p154, %p155
      %p158 = scmp.ne.s32.totalorder %s141, %s157
      %p159 = scmp.eq.s32.totalorder %s28, 0
      %p160 = por %p158, %p159
      %s161 = ssub.s32 %s29, %s41
      %s162 = ssub.s32 %s30, %s37
      %s163 = sor.u32 %s161, %s162
      %p164 = scmp.eq.s32.totalorder %s163, 0
      %s166 = sadd.s32 %s165, 1
      %s167 = scalar_select %p164, %s165, %s166
      %p170 = pneg %p164
      %p171 = scmp.eq.s32.totalorder %s22, 1
      %p172 = por %p170, %p171
      %p173 = scmp.ne.s32.totalorder %s165, %s168
      %p174 = scmp.eq.s32.totalorder %s22, 0
      %p175 = por %p173, %p174
      %p176 = scmp.ne.s32.totalorder %s165, %s168
      %p177 = scmp.eq.s32.totalorder %s27, 1
      %p178 = por %p176, %p177
      %p179 = scmp.ne.s32.totalorder %s168, %s169
      %p180 = scmp.eq.s32.totalorder %s27, 0
      %p181 = por %p179, %p180
      %p182 = scmp.ne.s32.totalorder %s168, %s169
      %p183 = scmp.eq.s32.totalorder %s28, 1
      %p184 = por %p182, %p183
      %p186 = scmp.ne.s32.totalorder %s169, %s185
      %p187 = scmp.eq.s32.totalorder %s28, 0
      %p188 = por %p186, %p187
      %p189 = scmp.le.s32.totalorder 1, %s22
      %p190 = scmp.lt.s32.totalorder %s22, 3
      %p191 = pnand %p189, %p190
      %p192 = pneg %p191
      // Predicated region
      $region9: #{tpu_custom_call.1} parent=5 // pred_check
        _
      $region10: #{tpu_custom_call.1} parent=5 // pred_check_branch
        %194 = sbr.rel (%p191) target = $region12
      $region11: #{tpu_custom_call.1} parent=5 // pred_region
        %s195 = ssub.s32 %s22, 1
        // Predicated region
        $region13: #{tpu_custom_call.1} parent=11 // pred_check
          %p196 = pneg %p55
        $region14: #{tpu_custom_call.1} parent=11 // pred_check_branch
          %198 = sbr.rel (%p196) target = $region16
        $region15: #{tpu_custom_call.1} parent=11 // pred_region
          %s200 = ssub.s32 16, 16
          %201 = vsyncadd [#allocation5], %s200
          %204 = dma.hbm_to_smem %s0, 16, [#allocation2], [#allocation5]
        $region16: #{tpu_custom_call.1} parent=11 // pred_fallthru
          _
        // Predicated region
        $region17: #{tpu_custom_call.1} parent=11 // pred_check
          %p205 = pneg %p76
        $region18: #{tpu_custom_call.1} parent=11 // pred_check_branch
          %207 = sbr.rel (%p205) target = $region20
        $region19: #{tpu_custom_call.1} parent=11 // pred_region
          %s209 = ssub.s32 128, 128
          %210 = vsyncadd [#allocation7], %s209
          %213 = dma.hbm_to_smem %s1, 128, [#allocation6], [#allocation7]
        $region20: #{tpu_custom_call.1} parent=11 // pred_fallthru
          _
        // Predicated region
        $region21: #{tpu_custom_call.1} parent=11 // pred_check
          %p214 = pneg %p97
        $region22: #{tpu_custom_call.1} parent=11 // pred_check_branch
          %216 = sbr.rel (%p214) target = $region24
        $region23: #{tpu_custom_call.1} parent=11 // pred_region
          %s218 = ssub.s32 128, 128
          %219 = vsyncadd [#allocation7], %s218
          %222 = dma.hbm_to_smem %s2, 128, [#allocation8], [#allocation7]
        $region24: #{tpu_custom_call.1} parent=11 // pred_fallthru
          _
      $region12: #{tpu_custom_call.1} parent=5 // pred_fallthru
        _
      %p223 = scmp.lt.s32.totalorder %s22, 2
      // Predicated region
      $region25: #{tpu_custom_call.1} parent=5 // pred_check
        %p224 = pneg %p223
      $region26: #{tpu_custom_call.1} parent=5 // pred_check_branch
        %226 = sbr.rel (%p224) target = $region28
      $region27: #{tpu_custom_call.1} parent=5 // pred_region
        // Predicated region
        $region29: #{tpu_custom_call.1} parent=27 // pred_check
          %p227 = pneg %p119
        $region30: #{tpu_custom_call.1} parent=27 // pred_check_branch
          %229 = sbr.rel (%p227) target = $region32
        $region31: #{tpu_custom_call.1} parent=27 // pred_region
          %s230 = sand.u32 %s109, 1
          %s231 = scalar_lea.sflag [#allocation3], %s230
          %s232 = sand.u32 %s109, 1
          %s233 = smul.addr %s232, 8
          %s234 = scalar_lea.vmem [#allocation9], %s233
          %s235 = smul.u32 2, %s30
          %s237 = ssub.s32 128, 128
          %238 = vsyncadd %s231, %s237
          %s239 = smul.addr %s29, 2
          %s240 = sadd.s32 %s235, %s239
          %s241 = smul.addr %s240, 64
          %s242 = scalar_lea.hbm %s3, %s241
          %s244 = sshll.u32 %s234, 4
          %s245 = int_to_ptr.vmem [resolvable:$true] %s244
          %247 = dma.hbm_to_vmem [thread:$0]  %s242, 128, %s245, %s231
        $region32: #{tpu_custom_call.1} parent=27 // pred_fallthru
          _
        // Predicated region
        $region33: #{tpu_custom_call.1} parent=27 // pred_check
          %p248 = pneg %p147
        $region34: #{tpu_custom_call.1} parent=27 // pred_check_branch
          %250 = sbr.rel (%p248) target = $region36
        $region35: #{tpu_custom_call.1} parent=27 // pred_region
          %s251 = sand.u32 %s137, 1
          %s252 = scalar_lea.sflag [#allocation11], %s251
          %s253 = sand.u32 %s137, 1
          %s254 = smul.addr %s253, 8
          %s255 = scalar_lea.vmem [#allocation10], %s254
          %s256 = smul.u32 2, %s30
          %s258 = ssub.s32 128, 128
          %259 = vsyncadd %s252, %s258
          %s260 = smul.addr %s29, 2
          %s261 = sadd.s32 %s256, %s260
          %s262 = smul.addr %s261, 64
          %s263 = scalar_lea.hbm %s4, %s262
          %s265 = sshll.u32 %s255, 4
          %s266 = int_to_ptr.vmem [resolvable:$true] %s265
          %268 = dma.hbm_to_vmem [thread:$0]  %s263, 128, %s266, %s252
        $region36: #{tpu_custom_call.1} parent=27 // pred_fallthru
          _
      $region28: #{tpu_custom_call.1} parent=5 // pred_fallthru
        _
      %p269 = scmp.le.s32.totalorder 1, %s22
      %p270 = scmp.lt.s32.totalorder %s22, 3
      %p271 = pnand %p269, %p270
      %p272 = pneg %p271
      // Predicated region
      $region37: #{tpu_custom_call.1} parent=5 // pred_check
        _
      $region38: #{tpu_custom_call.1} parent=5 // pred_check_branch
        %274 = sbr.rel (%p271) target = $region40
      $region39: #{tpu_custom_call.1} parent=5 // pred_region
        %s275 = ssub.s32 %s22, 1
        // Predicated region
        $region41: #{tpu_custom_call.1} parent=39 // pred_check
          %p276 = pneg %p55
        $region42: #{tpu_custom_call.1} parent=39 // pred_check_branch
          %278 = sbr.rel (%p276) target = $region44
        $region43: #{tpu_custom_call.1} parent=39 // pred_region
          %279 = dma.done [#allocation5], 16
        $region44: #{tpu_custom_call.1} parent=39 // pred_fallthru
          _
        // Predicated region
        $region45: #{tpu_custom_call.1} parent=39 // pred_check
          %p280 = pneg %p76
        $region46: #{tpu_custom_call.1} parent=39 // pred_check_branch
          %282 = sbr.rel (%p280) target = $region48
        $region47: #{tpu_custom_call.1} parent=39 // pred_region
          %283 = dma.done [#allocation7], 128
        $region48: #{tpu_custom_call.1} parent=39 // pred_fallthru
          _
        // Predicated region
        $region49: #{tpu_custom_call.1} parent=39 // pred_check
          %p284 = pneg %p97
        $region50: #{tpu_custom_call.1} parent=39 // pred_check_branch
          %286 = sbr.rel (%p284) target = $region52
        $region51: #{tpu_custom_call.1} parent=39 // pred_region
          %287 = dma.done [#allocation7], 128
        $region52: #{tpu_custom_call.1} parent=39 // pred_fallthru
          _
        %s288 = sand.u32 %s112, 1
        %s289 = scalar_lea.sflag [#allocation3], %s288
        %s290 = sand.u32 %s112, 1
        %s291 = smul.addr %s290, 8
        %s292 = scalar_lea.vmem [#allocation9], %s291
        // Predicated region
        $region53: #{tpu_custom_call.1} parent=39 // pred_check
          %p293 = pneg %p125
        $region54: #{tpu_custom_call.1} parent=39 // pred_check_branch
          %295 = sbr.rel (%p293) target = $region56
        $region55: #{tpu_custom_call.1} parent=39 // pred_region
          %296 = dma.done %s289, 128
        $region56: #{tpu_custom_call.1} parent=39 // pred_fallthru
          _
        %s297 = sand.u32 %s140, 1
        %s298 = scalar_lea.sflag [#allocation11], %s297
        %s299 = sand.u32 %s140, 1
        %s300 = smul.addr %s299, 8
        %s301 = scalar_lea.vmem [#allocation10], %s300
        // Predicated region
        $region57: #{tpu_custom_call.1} parent=39 // pred_check
          %p302 = pneg %p153
        $region58: #{tpu_custom_call.1} parent=39 // pred_check_branch
          %304 = sbr.rel (%p302) target = $region60
        $region59: #{tpu_custom_call.1} parent=39 // pred_region
          %305 = dma.done %s298, 128
        $region60: #{tpu_custom_call.1} parent=39 // pred_fallthru
          _
        %306 = sfence
        %p307 = pneg %p55
        %p308 = pneg %p52
        %p309 = pneg %p76
        %p310 = pneg %p73
        %p311 = pneg %p97
        %p312 = pneg %p94
        %s313 = sand.u32 %s112, 1
        %s314 = scalar_lea.sflag [#allocation3], %s313
        %s315 = sand.u32 %s112, 1
        %s316 = smul.addr %s315, 8
        %s317 = scalar_lea.vmem [#allocation9], %s316
        %p318 = pneg %p125
        %p319 = pneg %p122
        %s320 = sand.u32 %s140, 1
        %s321 = scalar_lea.sflag [#allocation11], %s320
        %s322 = sand.u32 %s140, 1
        %s323 = smul.addr %s322, 8
        %s324 = scalar_lea.vmem [#allocation10], %s323
        %p325 = pneg %p153
        %p326 = pneg %p150
        %p327 = pneg %p181
        %p328 = pneg %p178
        %s329 = sand.u32 %s168, 1
        %s330 = scalar_lea.sflag [#allocation4], %s329
        %s331 = sand.u32 %s168, 1
        %s332 = smul.addr %s331, 8
        %s333 = scalar_lea.vmem [#allocation12], %s332
        %s334 = smul.u32 2, %s32
        %s335 = smul.u32 2, %s32
        %s336 = smul.u32 2, %s32
        %s337 = sld [smem:[#allocation2 + %s31]]
        %s338 = sld [smem:[#allocation6 + %s337]]
        %s339 = sld [smem:[#allocation8 + %s337]]
        %v340 = vld [vmem:[%s292] sm:$0xff]
        %v341 = vld [vmem:[%s301] sm:$0xff]
        %v342 = vmul.f32 %v340, 2.0
        %v343 = vsub.f32 %v342, 1.0
        %v344 = vstv %s338
        %v345 = vmul.f32 %v344, %v343
        %v346 = vstv %s339
        %v347 = vmul.f32 %v346, %v341
        %v348 = vadd.f32 %v345, %v347
        %349 = vst [vmem:[%s333] sm:$0xff] %v348
        %s350 = sand.u32 %s168, 1
        %s351 = scalar_lea.sflag [#allocation4], %s350
        %s352 = sand.u32 %s168, 1
        %s353 = smul.addr %s352, 8
        %s354 = scalar_lea.vmem [#allocation12], %s353
        // Predicated region
        $region61: #{tpu_custom_call.1} parent=39 // pred_check
          %p355 = pneg %p178
        $region62: #{tpu_custom_call.1} parent=39 // pred_check_branch
          %357 = sbr.rel (%p355) target = $region64
        $region63: #{tpu_custom_call.1} parent=39 // pred_region
          %s358 = smul.u32 2, %s32
          %s360 = ssub.s32 128, 128
          %361 = vsyncadd %s351, %s360
          %s362 = smul.addr %s31, 2
          %s363 = sadd.s32 %s358, %s362
          %s364 = smul.addr %s363, 64
          %s365 = scalar_lea.hbm %s5, %s364
          %s367 = sshll.u32 %s354, 4
          %s368 = int_to_ptr.vmem [resolvable:$true] %s367
          %370 = dma.vmem_to_hbm [thread:$0]  %s368, 128, %s365, %s351
        $region64: #{tpu_custom_call.1} parent=39 // pred_fallthru
          _
      $region40: #{tpu_custom_call.1} parent=5 // pred_fallthru
        _
      %p371 = scmp.le.s32.totalorder 2, %s22
      // Predicated region
      $region65: #{tpu_custom_call.1} parent=5 // pred_check
        %p372 = pneg %p371
      $region66: #{tpu_custom_call.1} parent=5 // pred_check_branch
        %374 = sbr.rel (%p372) target = $region68
      $region67: #{tpu_custom_call.1} parent=5 // pred_region
        %s375 = ssub.s32 %s22, 2
        // Predicated region
        $region69: #{tpu_custom_call.1} parent=67 // pred_check
          %p376 = pneg %p184
        $region70: #{tpu_custom_call.1} parent=67 // pred_check_branch
          %378 = sbr.rel (%p376) target = $region72
        $region71: #{tpu_custom_call.1} parent=67 // pred_region
          %s379 = sand.u32 %s169, 1
          %s380 = scalar_lea.sflag [#allocation4], %s379
          %s381 = sand.u32 %s169, 1
          %s382 = smul.addr %s381, 8
          %s383 = scalar_lea.vmem [#allocation12], %s382
          %384 = dma.done %s380, 128
        $region72: #{tpu_custom_call.1} parent=67 // pred_fallthru
          _
      $region68: #{tpu_custom_call.1} parent=5 // pred_fallthru
        _
    $region6: #{tpu_custom_call.1} parent=1 // loop_footer
      %s26 = sadd.s32 1, %s22
    $region7: #{tpu_custom_call.1} parent=1 // loop_footer_branch
      %21 = sbr.rel target = $region3
    $region8: #{tpu_custom_call.1} parent=1 // loop_exit
      _
    %385 = vsyncpa [#allocation3], 1
    %s386 = scalar_lea.sflag [#allocation3], 1
    %387 = vsyncpa %s386, 1
    %388 = vsyncpa [#allocation11], 1
    %s389 = scalar_lea.sflag [#allocation11], 1
    %390 = vsyncpa %s389, 1
    %391 = vsyncpa [#allocation4], 1
    %s392 = scalar_lea.sflag [#allocation4], 1
    %393 = vsyncpa %s392, 1
    %394 = vsyncpa [#allocation5], 1
    %s395 = scalar_lea.sflag [#allocation5], 1
    %396 = vsyncpa %s395, 1
    %397 = vsyncpa [#allocation7], 1

</llo_original>
